<compile_context>
chip_gen: v5e
topology: v5e:2x2
jax: 0.10.0
libtpu: 0.0.40
codegen_flags: <defaults>
</compile_context>

<pallas_src>
import functools
import math

import jax
import jax.numpy as jnp
from jax.experimental import pallas as pl
from jax.experimental.pallas import tpu as pltpu


def _round_up(x, m):
    return (x + m - 1) // m * m


_NEG_BIG = -1e30   # finite "-inf" for the padded-key bias (avoids inf-inf NaNs)


# --------------------------------------------------------------------------
# Kernel 1: fused q/k/v projection (one wide, lane-dense matmul over rows)
# --------------------------------------------------------------------------
def _qkv_proj_kernel(x_ref, w_ref, b_ref, q_ref, k_ref, v_ref, *, dqp, dkp):
    # x_ref: (tr, d_model) bf16   w_ref: (d_model, Dtot) bf16   b_ref: (1, Dtot) f32
    qkv = jnp.dot(x_ref[...], w_ref[...],
                  preferred_element_type=jnp.float32) + b_ref[...]
    # static, 128-aligned column slices of the fused result
    q_ref[...] = qkv[:, :dqp].astype(q_ref.dtype)
    k_ref[...] = qkv[:, dqp:dqp + dkp].astype(k_ref.dtype)
    v_ref[...] = qkv[:, dqp + dkp:].astype(v_ref.dtype)


# --------------------------------------------------------------------------
# Kernel 2: flash attention with online softmax over kv tiles (tq != tk)
# --------------------------------------------------------------------------
def _lane_bcast(x, n):
    """x: (rows, L) with identical values in every lane -> (rows, n)."""
    rows, l = x.shape
    if n == l:
        return x
    if n % l == 0:
        return jnp.tile(x, (1, n // l))           # whole-vreg copies, no relayout
    return jnp.broadcast_to(x[:, :1], (rows, n))  # tiny (sub-128) fallback


def _flash_attn_kernel(*refs, has_mask):
    if has_mask:
        q_ref, k_ref, v_ref, mask_ref, o_ref, m_sc, l_sc, acc_sc = refs
    else:
        q_ref, k_ref, v_ref, o_ref, m_sc, l_sc, acc_sc = refs
        mask_ref = None

    ki = pl.program_id(2)

    @pl.when(ki == 0)
    def _init():
        m_sc[...] = jnp.full(m_sc.shape, -jnp.inf, m_sc.dtype)
        l_sc[...] = jnp.zeros(l_sc.shape, l_sc.dtype)
        acc_sc[...] = jnp.zeros(acc_sc.shape, acc_sc.dtype)

    q = q_ref[0]                                  # (tq, DQP) bf16, scale pre-folded
    k = k_ref[0]                                  # (tk, DKP) bf16
    # q @ k^T without materializing k.T (contract axis 1 of both operands)
    s = jax.lax.dot_general(q, k,
                            dimension_numbers=(((1,), (1,)), ((), ())),
                            preferred_element_type=jnp.float32)   # (tq, tk) f32
    if has_mask:                                  # additive 0 / -1e30 bias row
        s = s + mask_ref[...]

    tk = s.shape[1]
    dv = acc_sc.shape[1]

    # online softmax: m/l kept lane-replicated (tq, 128) -> dense vreg updates,
    # no masked 1-lane stores; widening to tk/dvp is whole-vreg tiling.
    m_prev = m_sc[...]                                            # (tq, 128)
    m_curr = jnp.max(s, axis=-1, keepdims=True)                   # (tq, 1)
    m_next = jnp.maximum(m_prev, m_curr)                          # (tq, 128)
    alpha = jnp.exp(m_prev - m_next)                              # (tq, 128) f32
    # bf16 exp: ~2x EUP throughput on v6e/v7x; p in [0, 1] so bf16 is safe.
    p = jnp.exp((s - _lane_bcast(m_next, tk)).astype(jnp.bfloat16))   # (tq, tk)
    l_curr = jnp.sum(p.astype(jnp.float32), axis=-1, keepdims=True)   # (tq, 1)
    l_sc[...] = alpha * l_sc[...] + l_curr
    pv = jnp.dot(p, v_ref[0], preferred_element_type=jnp.float32)     # (tq, DVP)
    acc_sc[...] = _lane_bcast(alpha, dv) * acc_sc[...] + pv
    m_sc[...] = m_next

    @pl.when(ki == pl.num_programs(2) - 1)
    def _finalize():
        inv_l = pl.reciprocal(l_sc[...], approx=True)             # (tq, 128)
        o_ref[0] = (acc_sc[...] * _lane_bcast(inv_l, dv)).astype(o_ref.dtype)


# --------------------------------------------------------------------------
# Wrapper
# --------------------------------------------------------------------------
def self_attention(x, params, *, q_seq_tile=512, kv_seq_tile=256,
                   proj_row_tile=1024):
    """x: (B, S, d_model) float32.  params from pack_params().

    q_seq_tile (large) and kv_seq_tile (256-512) are decoupled: K/V HBM
    traffic scales with the number of q tiles, so the q tile is made as large
    as VMEM comfortably allows on all generations.
    """
    B, S, d_model = x.shape
    w_packed = params["w_packed"]          # (d_model, Dtot) bf16
    b_packed = params["b_packed"]          # (1, Dtot) f32
    dqp, dkp, dvp = params["dqp"], params["dkp"], params["dvp"]
    dtot = dqp + dkp + dvp
    out_dtype = x.dtype

    # ---- tile selection --------------------------------------------------
    s8 = _round_up(S, 8)
    if s8 <= kv_seq_tile:
        tk = s8                                   # single kv tile
    else:
        n_kv = -(-S // kv_seq_tile)               # balanced, 128-aligned kv tile
        tk = _round_up(-(-S // n_kv), 128)
    tq = min(tk * max(1, q_seq_tile // tk), _round_up(S, tk))
    s_pad = _round_up(S, tq)                      # multiple of both tq and tk
    has_mask = s_pad != S

    if has_mask:
        x = jnp.pad(x, ((0, 0), (0, s_pad - S), (0, 0)))

    # cast once in the wrapper: halves the x HBM read, MXU operand was bf16 anyway
    x_rows = x.astype(jnp.bfloat16).reshape(B * s_pad, d_model)
    n_rows = B * s_pad

    # projection row tile: largest multiple of 8 dividing n_rows, <= proj_row_tile
    tr = 8
    for cand in range(min(proj_row_tile, n_rows), 7, -1):
        if cand % 8 == 0 and n_rows % cand == 0:
            tr = cand
            break

    vmem_limit = 48 * 1024 * 1024   # > 32 MiB default, safe on v7x's 64 MiB VMEM
    cparams_proj = pltpu.CompilerParams(
        dimension_semantics=("parallel",), vmem_limit_bytes=vmem_limit)
    cparams_attn = pltpu.CompilerParams(
        dimension_semantics=("parallel", "parallel", "arbitrary"),
        vmem_limit_bytes=vmem_limit)

    # ---- fused q/k/v projection over flattened (B*S) rows -----------------
    # TODO(synk): for very large d_model (~2K+) tile the dtot column axis (or
    # single-buffer the constant-index weight block) so the packed weight's
    # double buffer does not blow past v7x's 64 MiB VMEM.
    q2, k2, v2 = pl.pallas_call(
        functools.partial(_qkv_proj_kernel, dqp=dqp, dkp=dkp),
        out_shape=(
            jax.ShapeDtypeStruct((n_rows, dqp), jnp.bfloat16),
            jax.ShapeDtypeStruct((n_rows, dkp), jnp.bfloat16),
            jax.ShapeDtypeStruct((n_rows, dvp), jnp.bfloat16),
        ),
        grid_spec=pltpu.PrefetchScalarGridSpec(
            num_scalar_prefetch=0,
            grid=(n_rows // tr,),
            in_specs=[
                pl.BlockSpec((tr, d_model), lambda r: (r, 0)),     # x rows
                pl.BlockSpec((d_model, dtot), lambda r: (0, 0)),   # packed W
                pl.BlockSpec((1, dtot), lambda r: (0, 0)),         # packed b
            ],
            out_specs=(
                pl.BlockSpec((tr, dqp), lambda r: (r, 0)),
                pl.BlockSpec((tr, dkp), lambda r: (r, 0)),
                pl.BlockSpec((tr, dvp), lambda r: (r, 0)),
            ),
        ),
        compiler_params=cparams_proj,
    )(x_rows, w_packed, b_packed)

    q = q2.reshape(B, s_pad, dqp)
    k = k2.reshape(B, s_pad, dkp)
    v = v2.reshape(B, s_pad, dvp)

    # ---- flash attention over (B, q_tiles, kv_tiles), tq decoupled from tk ----
    in_specs = [
        pl.BlockSpec((1, tq, dqp), lambda b, qi, ki: (b, qi, 0)),  # q
        pl.BlockSpec((1, tk, dkp), lambda b, qi, ki: (b, ki, 0)),  # k
        pl.BlockSpec((1, tk, dvp), lambda b, qi, ki: (b, ki, 0)),  # v
    ]
    flash_inputs = [q, k, v]
    if has_mask:
        key_idx = jnp.arange(s_pad, dtype=jnp.int32)
        mask = jnp.where(key_idx < S, 0.0, _NEG_BIG).astype(jnp.float32)[None, :]
        in_specs.append(pl.BlockSpec((1, tk), lambda b, qi, ki: (0, ki)))
        flash_inputs.append(mask)

    out_padded = pl.pallas_call(
        functools.partial(_flash_attn_kernel, has_mask=has_mask),
        out_shape=jax.ShapeDtypeStruct((B, s_pad, dvp), out_dtype),
        grid_spec=pltpu.PrefetchScalarGridSpec(
            num_scalar_prefetch=0,
            grid=(B, s_pad // tq, s_pad // tk),
            in_specs=in_specs,
            out_specs=pl.BlockSpec((1, tq, dvp), lambda b, qi, ki: (b, qi, 0)),
            scratch_shapes=[
                pltpu.VMEM((tq, 128), jnp.float32),   # running max (lane-replicated)
                pltpu.VMEM((tq, 128), jnp.float32),   # running denom (lane-replicated)
                pltpu.VMEM((tq, dvp), jnp.float32),   # output accumulator
            ],
        ),
        compiler_params=cparams_attn,
    )(*flash_inputs)

    # drop sequence / lane padding (kernel stores stay unmasked & lane-dense)
    return out_padded[:, :S, :d_model]


# --------------------------------------------------------------------------
# Parameter init / packing
# --------------------------------------------------------------------------
def init_params(key, d_model, d_key):
    """Deterministic init mimicking nn.Linear's uniform(-1/sqrt(fan_in), ...).
    Weights kept in transposed (in, out) form (== PyTorch W.T)."""
    ks = jax.random.split(key, 6)
    bound = 1.0 / math.sqrt(d_model)
    u = lambda k, shape: jax.random.uniform(k, shape, jnp.float32, -bound, bound)
    return {
        "wq_t": u(ks[0], (d_model, d_key)),
        "bq":   u(ks[1], (1, d_key)),
        "wk_t": u(ks[2], (d_model, d_key)),
        "bk":   u(ks[3], (1, d_key)),
        "wv_t": u(ks[4], (d_model, d_model)),
        "bv":   u(ks[5], (1, d_model)),
    }


def pack_params(raw):
    """Pack Wq|Wk|Wv into one lane-dense (d_model, Dtot) bf16 weight.
    The 1/sqrt(d_key) softmax scale is folded into Wq/bq."""
    d_model, d_key = raw["wq_t"].shape
    scale = 1.0 / math.sqrt(d_key)
    dqp = _round_up(d_key, 128)
    dkp = _round_up(d_key, 128)
    dvp = _round_up(d_model, 128)
    dtot = dqp + dkp + dvp

    w = jnp.zeros((d_model, dtot), jnp.float32)
    w = w.at[:, :d_key].set(raw["wq_t"] * scale)
    w = w.at[:, dqp:dqp + d_key].set(raw["wk_t"])
    w = w.at[:, dqp + dkp:dqp + dkp + d_model].set(raw["wv_t"])

    b = jnp.zeros((1, dtot), jnp.float32)
    b = b.at[:, :d_key].set(raw["bq"] * scale)
    b = b.at[:, dqp:dqp + d_key].set(raw["bk"])
    b = b.at[:, dqp + dkp:dqp + dkp + d_model].set(raw["bv"])

    return {
        "w_packed": w.astype(jnp.bfloat16),   # bf16 MXU operands, f32 accumulation
        "b_packed": b,                        # bias stays f32 (added post-accum)
        "dqp": dqp, "dkp": dkp, "dvp": dvp,
    }


def self_attention_ref(x, raw):
    """Pure-JAX f32 reference for sanity checking."""
    q = x @ raw["wq_t"] + raw["bq"]
    k = x @ raw["wk_t"] + raw["bk"]
    v = x @ raw["wv_t"] + raw["bv"]
    scores = jnp.einsum("bqd,bkd->bqk", q, k) / math.sqrt(q.shape[-1])
    attn = jax.nn.softmax(scores, axis=-1)
    return jnp.einsum("bqk,bkd->bqd", attn, v)


if __name__ == "__main__":
    B, S, d_model, d_key = 2, 8, 32, 16
    key = jax.random.PRNGKey(0)
    kx, kp = jax.random.split(key)
    x = jax.random.normal(kx, (B, S, d_model), dtype=jnp.float32)
    raw = init_params(kp, d_model, d_key)
    params = pack_params(raw)

    out = self_attention(x, params)
    out = jax.block_until_ready(out)

    ref = self_attention_ref(x, raw)
    assert out.shape == (B, S, d_model)
    # bf16 MXU operands + bf16 exp + approx reciprocal => relaxed tolerance
    assert jnp.allclose(out, ref, atol=2e-2, rtol=2e-2), \
        float(jnp.max(jnp.abs(out - ref)))

    print("KERNEL_OK")
</pallas_src>

<mosaic_0001>
module attributes {stable_mosaic.version = 11 : i64} {
  func.func @_qkv_proj_kernel(%arg0: i32, %arg1: memref<16x32xbf16, #tpu.memory_space<vmem>>, %arg2: memref<32x384xbf16, #tpu.memory_space<vmem>>, %arg3: memref<1x384xf32, #tpu.memory_space<vmem>>, %arg4: memref<16x128xbf16, #tpu.memory_space<vmem>>, %arg5: memref<16x128xbf16, #tpu.memory_space<vmem>>, %arg6: memref<16x128xbf16, #tpu.memory_space<vmem>>) attributes {dimension_semantics = [#tpu.dimension_semantics<parallel>], iteration_bounds = array<i64: 1>, scalar_prefetch = 0 : i64, scratch_operands = 0 : i64, tpu.core_type = #tpu.core_type<tc>, window_params = [{transform_indices = @transform_0, window_bounds = array<i64: 16, 32>}, {pipeline_mode = #tpu.pipeline_mode<synchronous>, transform_indices = @transform_1, window_bounds = array<i64: 32, 384>}, {pipeline_mode = #tpu.pipeline_mode<synchronous>, transform_indices = @transform_2, window_bounds = array<i64: 1, 384>}, {transform_indices = @transform_3, window_bounds = array<i64: 16, 128>}, {transform_indices = @transform_4, window_bounds = array<i64: 16, 128>}, {transform_indices = @transform_5, window_bounds = array<i64: 16, 128>}]} {
    %c0 = arith.constant 0 : index
    %c0_0 = arith.constant 0 : index
    %0 = vector.load %arg1[%c0, %c0_0] : memref<16x32xbf16, #tpu.memory_space<vmem>>, vector<16x32xbf16>
    %c0_1 = arith.constant 0 : index
    %c0_2 = arith.constant 0 : index
    %1 = vector.load %arg2[%c0_1, %c0_2] : memref<32x384xbf16, #tpu.memory_space<vmem>>, vector<32x384xbf16>
    %cst = arith.constant dense<0.000000e+00> : vector<16x384xf32>
    %2 = tpu.matmul %0, %1, %cst {dimension_numbers = #tpu.dot_dimension_numbers<[1], [0], [0], [1], [0, 0, 1, 1], [], []>} : vector<16x32xbf16>, vector<32x384xbf16>, vector<16x384xf32> -> vector<16x384xf32>
    %c0_3 = arith.constant 0 : index
    %c0_4 = arith.constant 0 : index
    %3 = vector.load %arg3[%c0_3, %c0_4] : memref<1x384xf32, #tpu.memory_space<vmem>>, vector<1x384xf32>
    %4 = vector.broadcast %3 : vector<1x384xf32> to vector<16x384xf32>
    %5 = arith.addf %2, %4 : vector<16x384xf32>
    %6 = vector.extract_strided_slice %5 {offsets = [0, 0], sizes = [16, 128], strides = [1, 1]} : vector<16x384xf32> to vector<16x128xf32>
    %7 = arith.truncf %6 : vector<16x128xf32> to vector<16x128xbf16>
    %c0_5 = arith.constant 0 : index
    %c0_6 = arith.constant 0 : index
    %8 = vector.load %arg4[%c0_5, %c0_6] : memref<16x128xbf16, #tpu.memory_space<vmem>>, vector<16x128xbf16>
    tpu.vector_store %arg4[%c0_5, %c0_6], %7 {strides = array<i32>} : memref<16x128xbf16, #tpu.memory_space<vmem>>, vector<16x128xbf16>,
    %9 = vector.extract_strided_slice %5 {offsets = [0, 128], sizes = [16, 128], strides = [1, 1]} : vector<16x384xf32> to vector<16x128xf32>
    %10 = arith.truncf %9 : vector<16x128xf32> to vector<16x128xbf16>
    %c0_7 = arith.constant 0 : index
    %c0_8 = arith.constant 0 : index
    %11 = vector.load %arg5[%c0_7, %c0_8] : memref<16x128xbf16, #tpu.memory_space<vmem>>, vector<16x128xbf16>
    tpu.vector_store %arg5[%c0_7, %c0_8], %10 {strides = array<i32>} : memref<16x128xbf16, #tpu.memory_space<vmem>>, vector<16x128xbf16>,
    %12 = vector.extract_strided_slice %5 {offsets = [0, 256], sizes = [16, 128], strides = [1, 1]} : vector<16x384xf32> to vector<16x128xf32>
    %13 = arith.truncf %12 : vector<16x128xf32> to vector<16x128xbf16>
    %c0_9 = arith.constant 0 : index
    %c0_10 = arith.constant 0 : index
    %14 = vector.load %arg6[%c0_9, %c0_10] : memref<16x128xbf16, #tpu.memory_space<vmem>>, vector<16x128xbf16>
    tpu.vector_store %arg6[%c0_9, %c0_10], %13 {strides = array<i32>} : memref<16x128xbf16, #tpu.memory_space<vmem>>, vector<16x128xbf16>,
    return
  }
  func.func @transform_0(%arg0: i32) -> (i32, i32) {
    %c0_i32 = arith.constant 0 : i32
    %c0_i32_0 = arith.constant 0 : i32
    return %arg0, %c0_i32 : i32, i32
  }
  func.func @transform_1(%arg0: i32) -> (i32, i32) {
    %c0_i32 = arith.constant 0 : i32
    %c0_i32_0 = arith.constant 0 : i32
    %c0_i32_1 = arith.constant 0 : i32
    return %c0_i32, %c0_i32_0 : i32, i32
  }
  func.func @transform_2(%arg0: i32) -> (i32, i32) {
    %c0_i32 = arith.constant 0 : i32
    %c0_i32_0 = arith.constant 0 : i32
    %c0_i32_1 = arith.constant 0 : i32
    return %c0_i32, %c0_i32_0 : i32, i32
  }
  func.func @transform_3(%arg0: i32) -> (i32, i32) {
    %c0_i32 = arith.constant 0 : i32
    %c0_i32_0 = arith.constant 0 : i32
    return %arg0, %c0_i32 : i32, i32
  }
  func.func @transform_4(%arg0: i32) -> (i32, i32) {
    %c0_i32 = arith.constant 0 : i32
    %c0_i32_0 = arith.constant 0 : i32
    return %arg0, %c0_i32 : i32, i32
  }
  func.func @transform_5(%arg0: i32) -> (i32, i32) {
    %c0_i32 = arith.constant 0 : i32
    %c0_i32_0 = arith.constant 0 : i32
    return %arg0, %c0_i32 : i32, i32
  }
}

</mosaic_0001>

<llo_original>
// kernel: tpu_custom_call.1
$region0: #{tpu_custom_call.1}
  #allocation0 [shape = 'u32[]', space=smem, size = 0x4, offset = 0x4, fixed_abs, tag = 'smem constant byte address 0x4 - core index']
  #allocation1 [shape = 'u32[72,128]{1,0:T(1,128)}', space=vmem, size = 0x9000, scoped, tag = 'internal scratch']
  %s0 = inlined_call_operand.hbm [shape: bf16[16,32], index: 0, kind: input, shape index: {}]
  %s1 = inlined_call_operand.hbm [shape: bf16[32,384], index: 1, kind: input, shape index: {}]
  %s2 = inlined_call_operand.hbm [shape: f32[1,384], index: 2, kind: input, shape index: {}]
  %s3 = inlined_call_operand.hbm [shape: bf16[16,128], index: 3, kind: output, shape index: {0}]
  %s4 = inlined_call_operand.hbm [shape: bf16[16,128], index: 4, kind: output, shape index: {1}]
  %s5 = inlined_call_operand.hbm [shape: bf16[16,128], index: 5, kind: output, shape index: {2}]
  %6 = xla_tuple %s3, %s4, %s5
  %s7 = sld [smem:[#allocation0]]
  $region50: #{tpu_custom_call.1} parent=0
    _
  %s9 = ssub.s32 1, %s7
  %s10 = scalar_select 0, %s9, %s7
  $region1: #{tpu_custom_call.1} parent=0
    #allocation2 [shape = 'u8[4096]{0}', space=vmem, size = 0x1000, scoped, tag = 'input window, operand 0, single buffered']
    #allocation3 [shape = 's32[1]{0}', space=sflag, size = 0x4, scoped, tag = 'scoped memory for tpu_custom_call.1']
    #allocation4 [shape = 's32[1]{0}', space=sflag, size = 0x4, scoped, tag = 'scoped memory for tpu_custom_call.1']
    #allocation5 [shape = 'u8[24576]{0}', space=vmem, size = 0x6000, scoped, tag = 'input window, operand 1, single buffered']
    #allocation6 [shape = 's32[1]{0}', space=sflag, size = 0x4, scoped, tag = 'scoped memory for tpu_custom_call.1']
    #allocation7 [shape = 'u8[1536]{0}', space=vmem, size = 0x800, scoped, tag = 'input window, operand 2, single buffered']
    #allocation8 [shape = 'u8[4096]{0}', space=vmem, size = 0x1000, scoped, tag = 'output window, operand 0, single buffered']
    #allocation9 [shape = 'u8[4096]{0}', space=vmem, size = 0x1000, scoped, tag = 'output window, operand 1, single buffered']
    #allocation10 [shape = 's32[1]{0}', space=sflag, size = 0x4, scoped, tag = 'scoped memory for tpu_custom_call.1']
    #allocation11 [shape = 'u8[4096]{0}', space=vmem, size = 0x1000, scoped, tag = 'output window, operand 2, single buffered']
    %11 = vsyncpa [#allocation3], 0
    %12 = vsyncpa [#allocation6], 0
    %13 = vsyncpa [#allocation4], 0
    %14 = vsyncpa [#allocation10], 0
    // Predicated region
    $region2: #{tpu_custom_call.1} parent=1 // pred_check
      _
    $region3: #{tpu_custom_call.1} parent=1 // pred_check_branch
      %16 = sbr.rel (0) target = $region5
    $region4: #{tpu_custom_call.1} parent=1 // pred_region
      %18 = vsyncadd [#allocation3], 0
      %s19 = sshll.u32 %s0, 4
      %s20 = int_to_ptr.hbm [resolvable:$true] %s19
      %s21 = sshll.u32 [#allocation2], 4
      %s22 = int_to_ptr.vmem [resolvable:$true] %s21
      %27 = dma.hbm_to_vmem [thread:$0]  %s20, 128, %s22, [#allocation3], 64, 64, 4
    $region5: #{tpu_custom_call.1} parent=1 // pred_fallthru
      _
    // Predicated region
    $region6: #{tpu_custom_call.1} parent=1 // pred_check
      _
    $region7: #{tpu_custom_call.1} parent=1 // pred_check_branch
      %29 = sbr.rel (0) target = $region9
    $region8: #{tpu_custom_call.1} parent=1 // pred_region
      %31 = vsyncadd [#allocation6], 0
      %s32 = sshll.u32 %s1, 4
      %s33 = int_to_ptr.hbm [resolvable:$true] %s32
      %s34 = sshll.u32 [#allocation5], 4
      %s35 = int_to_ptr.vmem [resolvable:$true] %s34
      %40 = dma.hbm_to_vmem [thread:$0]  %s33, 768, %s35, [#allocation6], 192, 192, 12
    $region9: #{tpu_custom_call.1} parent=1 // pred_fallthru
      _
    // Predicated region
    $region10: #{tpu_custom_call.1} parent=1 // pred_check
      _
    $region11: #{tpu_custom_call.1} parent=1 // pred_check_branch
      %42 = sbr.rel (0) target = $region13
    $region12: #{tpu_custom_call.1} parent=1 // pred_region
      %44 = vsyncadd [#allocation6], 0
      %s46 = sshll.u32 %s2, 4
      %s47 = int_to_ptr.hbm [resolvable:$true] %s46
      %s48 = sshll.u32 [#allocation7], 4
      %s49 = int_to_ptr.vmem [resolvable:$true] %s48
      %51 = dma.hbm_to_vmem [thread:$0]  %s47, 48, %s49, [#allocation6]
    $region13: #{tpu_custom_call.1} parent=1 // pred_fallthru
      _
    // Predicated region
    $region14: #{tpu_custom_call.1} parent=1 // pred_check
      _
    $region15: #{tpu_custom_call.1} parent=1 // pred_check_branch
      %53 = sbr.rel (0) target = $region17
    $region16: #{tpu_custom_call.1} parent=1 // pred_region
      %55 = dma.done [#allocation3], 128
    $region17: #{tpu_custom_call.1} parent=1 // pred_fallthru
      _
    // Predicated region
    $region18: #{tpu_custom_call.1} parent=1 // pred_check
      _
    $region19: #{tpu_custom_call.1} parent=1 // pred_check_branch
      %57 = sbr.rel (0) target = $region21
    $region20: #{tpu_custom_call.1} parent=1 // pred_region
      %59 = dma.done [#allocation6], 768
    $region21: #{tpu_custom_call.1} parent=1 // pred_fallthru
      _
    // Predicated region
    $region22: #{tpu_custom_call.1} parent=1 // pred_check
      _
    $region23: #{tpu_custom_call.1} parent=1 // pred_check_branch
      %61 = sbr.rel (0) target = $region25
    $region24: #{tpu_custom_call.1} parent=1 // pred_region
      %63 = dma.done [#allocation6], 48
    $region25: #{tpu_custom_call.1} parent=1 // pred_fallthru
      _
    %v65 = vld [vmem:[#allocation2] sm:$0xf]
    %v66 = vld [vmem:[#allocation2 + $0x4] sm:$0xf]
    %v67 = vld [vmem:[#allocation5] sm:$0xff]
    %v68 = vld [vmem:[#allocation5 + $0x8] sm:$0xf]
    %v69 = vld [vmem:[#allocation5 + $0xc] sm:$0xff]
    %v70 = vld [vmem:[#allocation5 + $0x14] sm:$0xf]
    %v71 = vld [vmem:[#allocation5 + $0x18] sm:$0xff]
    %v72 = vld [vmem:[#allocation5 + $0x20] sm:$0xf]
    %v73 = vld [vmem:[#allocation5 + $0x24] sm:$0xff]
    %v74 = vld [vmem:[#allocation5 + $0x2c] sm:$0xf]
    %v75 = vld [vmem:[#allocation7] sm:$0x7]
    %v77 = vperm.slane %v75, 0
    %v78 = vperm.slane %v75, 1
    %v79 = vperm.slane %v75, 2
    %v85 = vunpack.c.l.b16 %v65
    %v86 = vunpack.c.l.b16 %v66
    %v87 = vpack.c.b16 %v86, %v85
    %v96 = vunpack.c.l.b16 %v67
    %v97 = vunpack.c.h.b16 %v67
    %v98 = vunpack.c.l.b16 %v68
    %v99 = vunpack.c.l.b16 %v69
    %v100 = vunpack.c.h.b16 %v69
    %v101 = vunpack.c.l.b16 %v70
    %v102 = vunpack.c.l.b16 %v71
    %v103 = vunpack.c.h.b16 %v71
    %v104 = vunpack.c.l.b16 %v72
    %v105 = vunpack.c.l.b16 %v73
    %v106 = vunpack.c.h.b16 %v73
    %v107 = vunpack.c.l.b16 %v74
    %v108 = vpack.c.b16 %v99, %v96
    %v109 = vpack.c.b16 %v100, %v97
    %v110 = vpack.c.b16 %v101, %v98
    %v111 = vpack.c.b16 %v105, %v102
    %v112 = vpack.c.b16 %v106, %v103
    %v113 = vpack.c.b16 %v107, %v104
    %vm120 = vcmask 261120
    %v122 = vsel %vm120, %v87, 0
    %124 = vmatpush.bf16.msra.mxu0 0
    %125 = vmatpush.bf16.msra.mxu0 0
    %126 = vmatpush.bf16.msra.mxu0 0
    %127 = vmatpush.bf16.msra.mxu0 0
    %128 = vmatpush.bf16.msra.mxu0 0
    %129 = vmatpush.bf16.msra.mxu0 0
    %130 = vmatpush.bf16.msra.mxu0 %v111
    %131 = vmatpush.bf16.msra.mxu0 %v108
    %132 = vmatmul.bf16.gmra.mxu0 %v122
    %v133 = vpop.f32.mrf.mxu0
    %v134 = vadd.f32 %v77, %v133
    %v135 = vpop.f32.mrf.mxu0
    %v136 = vadd.f32 %v77, %v135
    %137 = vdwg.mxu0
    %138 = vmatpush.bf16.msra.mxu0 0
    %139 = vmatpush.bf16.msra.mxu0 0
    %140 = vmatpush.bf16.msra.mxu0 0
    %141 = vmatpush.bf16.msra.mxu0 0
    %142 = vmatpush.bf16.msra.mxu0 0
    %143 = vmatpush.bf16.msra.mxu0 0
    %144 = vmatpush.bf16.msra.mxu0 %v112
    %145 = vmatpush.bf16.msra.mxu0 %v109
    %146 = vmatmul.bf16.gmra.mxu0 %v122
    %v147 = vpop.f32.mrf.mxu0
    %v148 = vadd.f32 %v78, %v147
    %v149 = vpop.f32.mrf.mxu0
    %v150 = vadd.f32 %v78, %v149
    %151 = vdwg.mxu0
    %152 = vmatpush.bf16.msra.mxu0 0
    %153 = vmatpush.bf16.msra.mxu0 0
    %154 = vmatpush.bf16.msra.mxu0 0
    %155 = vmatpush.bf16.msra.mxu0 0
    %156 = vmatpush.bf16.msra.mxu0 0
    %157 = vmatpush.bf16.msra.mxu0 0
    %158 = vmatpush.bf16.msra.mxu0 %v113
    %159 = vmatpush.bf16.msra.mxu0 %v110
    %160 = vmatmul.bf16.gmra.mxu0 %v122
    %v161 = vpop.f32.mrf.mxu0
    %v162 = vadd.f32 %v79, %v161
    %v163 = vpop.f32.mrf.mxu0
    %v164 = vadd.f32 %v79, %v163
    %165 = vdwg.mxu0
    %v166 = vpack.c.bf16 %v134, %v134
    %v167 = vpack.c.bf16 %v136, %v136
    %168 = vst [vmem:[#allocation8] sm:$0xf] %v166
    %169 = vst [vmem:[#allocation8 + $0x4] sm:$0xf] %v167
    %v170 = vpack.c.bf16 %v148, %v148
    %v171 = vpack.c.bf16 %v150, %v150
    %172 = vst [vmem:[#allocation9] sm:$0xf] %v170
    %173 = vst [vmem:[#allocation9 + $0x4] sm:$0xf] %v171
    %v174 = vpack.c.bf16 %v162, %v162
    %v175 = vpack.c.bf16 %v164, %v164
    %176 = vst [vmem:[#allocation11] sm:$0xf] %v174
    %177 = vst [vmem:[#allocation11 + $0x4] sm:$0xf] %v175
    // Predicated region
    $region26: #{tpu_custom_call.1} parent=1 // pred_check
      _
    $region27: #{tpu_custom_call.1} parent=1 // pred_check_branch
      %179 = sbr.rel (0) target = $region29
    $region28: #{tpu_custom_call.1} parent=1 // pred_region
      %181 = vsyncadd [#allocation4], 0
      %s182 = sshll.u32 [#allocation8], 4
      %s183 = int_to_ptr.vmem [resolvable:$true] %s182
      %s184 = sshll.u32 %s3, 4
      %s185 = int_to_ptr.hbm [resolvable:$true] %s184
      %190 = dma.vmem_to_hbm [thread:$0]  %s183, 128, %s185, [#allocation4], 64, 64, 4
    $region29: #{tpu_custom_call.1} parent=1 // pred_fallthru
      _
    // Predicated region
    $region30: #{tpu_custom_call.1} parent=1 // pred_check
      _
    $region31: #{tpu_custom_call.1} parent=1 // pred_check_branch
      %192 = sbr.rel (0) target = $region33
    $region32: #{tpu_custom_call.1} parent=1 // pred_region
      %194 = vsyncadd [#allocation10], 0
      %s195 = sshll.u32 [#allocation9], 4
      %s196 = int_to_ptr.vmem [resolvable:$true] %s195
      %s197 = sshll.u32 %s4, 4
      %s198 = int_to_ptr.hbm [resolvable:$true] %s197
      %203 = dma.vmem_to_hbm [thread:$0]  %s196, 128, %s198, [#allocation10], 64, 64, 4
    $region33: #{tpu_custom_call.1} parent=1 // pred_fallthru
      _
    // Predicated region
    $region34: #{tpu_custom_call.1} parent=1 // pred_check
      _
    $region35: #{tpu_custom_call.1} parent=1 // pred_check_branch
      %205 = sbr.rel (0) target = $region37
    $region36: #{tpu_custom_call.1} parent=1 // pred_region
      %207 = vsyncadd [#allocation10], 0
      %s208 = sshll.u32 [#allocation11], 4
      %s209 = int_to_ptr.vmem [resolvable:$true] %s208
      %s210 = sshll.u32 %s5, 4
      %s211 = int_to_ptr.hbm [resolvable:$true] %s210
      %216 = dma.vmem_to_hbm [thread:$0]  %s209, 128, %s211, [#allocation10], 64, 64, 4
    $region37: #{tpu_custom_call.1} parent=1 // pred_fallthru
      _
    // Predicated region
    $region38: #{tpu_custom_call.1} parent=1 // pred_check
      _
    $region39: #{tpu_custom_call.1} parent=1 // pred_check_branch
      %218 = sbr.rel (0) target = $region41
    $region40: #{tpu_custom_call.1} parent=1 // pred_region
      %220 = dma.done [#allocation4], 128
    $region41: #{tpu_custom_call.1} parent=1 // pred_fallthru
      _
    // Predicated region
    $region42: #{tpu_custom_call.1} parent=1 // pred_check
      _
    $region43: #{tpu_custom_call.1} parent=1 // pred_check_branch
      %222 = sbr.rel (0) target = $region45
    $region44: #{tpu_custom_call.1} parent=1 // pred_region
      %224 = dma.done [#allocation10], 128
    $region45: #{tpu_custom_call.1} parent=1 // pred_fallthru
      _
    // Predicated region
    $region46: #{tpu_custom_call.1} parent=1 // pred_check
      _
    $region47: #{tpu_custom_call.1} parent=1 // pred_check_branch
      %226 = sbr.rel (0) target = $region49
    $region48: #{tpu_custom_call.1} parent=1 // pred_region
      %228 = dma.done [#allocation10], 128
    $region49: #{tpu_custom_call.1} parent=1 // pred_fallthru
      _
    %229 = vsyncpa [#allocation3], 1
    %230 = vsyncpa [#allocation6], 1
    %231 = vsyncpa [#allocation4], 1
    %232 = vsyncpa [#allocation10], 1

</llo_original>
